<compile_context>
chip_gen: v7x
topology: tpu7x:2x2x1
jax: 0.10.0
libtpu: 0.0.40
codegen_flags: <defaults>
</compile_context>

<pallas_src>
import math
from functools import partial

import jax
import jax.numpy as jnp
from jax.experimental import pallas as pl
from jax.experimental.pallas import tpu as pltpu

_INV_SQRT2 = 1.0 / math.sqrt(2.0)
_VMEM_BUDGET = 40 << 20      # sizing budget for weights + tiles (fits v7x 64 MiB)
_VMEM_LIMIT_CAP = 48 << 20   # scoped-VMEM cap handed to Mosaic


def _round_up(a: int, b: int) -> int:
    return (a + b - 1) // b * b


def _cdiv(a: int, b: int) -> int:
    return (a + b - 1) // b


def _sublane_rows(dtype) -> int:
    """Native sublane pack: (8,128) for f32, (16,128) for bf16, (32,128) for 8-bit."""
    return max(8, 32 // jnp.dtype(dtype).itemsize)


def _choose_row_tile(m_rows, sub, k_pad, n_pad, c_itemsize, out_itemsize) -> int:
    """Largest row tile (<=1024) whose VMEM estimate fits the budget."""
    # Weights are single-buffered (pl.Buffered(1)); biases stay f32.
    weight_bytes = (k_pad * n_pad + n_pad * n_pad) * c_itemsize + 2 * n_pad * 4
    tm = _round_up(min(1024, m_rows), sub)
    while tm > sub:
        tile_bytes = (2 * tm * k_pad * c_itemsize      # double-buffered x tile
                      + 2 * tm * n_pad * out_itemsize  # double-buffered out tile
                      + 3 * tm * n_pad * 4)            # in-kernel f32 h / cast / y
        if weight_bytes + tile_bytes <= _VMEM_BUDGET:
            break
        tm = max(_round_up(tm // 2, sub), sub)
    return tm


def _fc_block_kernel(x_ref, w1_ref, b1_ref, w2_ref, b2_ref, o_ref):
    """One row tile of: GELU(x @ W1 + b1) @ W2 + b2 (fused, no HBM round-trip)."""
    x = x_ref[...]                                              # (TM, K_pad)

    # fc1: single MXU matmul, f32 accumulation.  (For bit-faithful f32 one
    # could add precision=HIGHEST at a throughput cost; not needed here.)
    h = jnp.dot(x, w1_ref[...], preferred_element_type=jnp.float32)
    h = h + b1_ref[...]                                         # bias kept in f32

    # Exact GELU (matches nn.GELU() default, approximate='none').
    h = 0.5 * h * (1.0 + jax.lax.erf(h * jnp.float32(_INV_SQRT2)))

    # fc2: second MXU matmul (operands in the compute dtype, f32 accumulation).
    y = jnp.dot(h.astype(w2_ref.dtype), w2_ref[...],
                preferred_element_type=jnp.float32)
    y = y + b2_ref[...]

    o_ref[...] = y.astype(o_ref.dtype)


@partial(jax.jit, static_argnames=("cout",))
def _fc_block_forward(x, w1_p, b1_p, w2_p, b2_p, *, cout):
    *lead, cin = x.shape
    k_pad, n_pad = w1_p.shape
    cdtype = w1_p.dtype
    out_dtype = x.dtype

    m = math.prod(lead) if lead else 1
    x2d = x.reshape(m, cin).astype(cdtype)

    sub = _sublane_rows(cdtype)
    m_rows = _round_up(max(m, 1), sub)

    tm = _choose_row_tile(m_rows, sub, k_pad, n_pad,
                          jnp.dtype(cdtype).itemsize,
                          jnp.dtype(out_dtype).itemsize)
    # Megacore: v7x has 2 TensorCores; give the "parallel" row axis >= 2 grid
    # steps whenever the row count allows a split.
    if _cdiv(m_rows, tm) < 2 and m_rows >= 2 * sub:
        tm = _round_up(_cdiv(m_rows, 2), sub)
    m_pad = _round_up(m_rows, tm)

    x_p = jnp.pad(x2d, ((0, m_pad - m), (0, k_pad - cin)))
    grid = (_cdiv(m_pad, tm),)

    # VMEM accounting: single-buffered weights + double-buffered x/out tiles
    # + in-kernel f32 intermediates; capped well below v7x's 64 MiB.
    w_bytes = ((k_pad * n_pad + n_pad * n_pad) * jnp.dtype(cdtype).itemsize
               + 2 * n_pad * 4)
    tile_bytes = (2 * tm * k_pad * jnp.dtype(cdtype).itemsize
                  + 2 * tm * n_pad * jnp.dtype(out_dtype).itemsize
                  + 3 * tm * n_pad * 4)
    vmem_limit = min(max(int((w_bytes + tile_bytes) * 1.25) + (2 << 20), 16 << 20),
                     _VMEM_LIMIT_CAP)

    def _resident(shape):
        # Grid-invariant operand: constant index_map, single-buffered.
        return pl.BlockSpec(shape, lambda i: (0, 0), pipeline_mode=pl.Buffered(1))

    out_p = pl.pallas_call(
        _fc_block_kernel,
        out_shape=jax.ShapeDtypeStruct((m_pad, n_pad), out_dtype),
        grid=grid,
        in_specs=[
            pl.BlockSpec((tm, k_pad), lambda i: (i, 0)),   # streaming x tile
            _resident((k_pad, n_pad)),                     # W1 (resident)
            _resident((1, n_pad)),                         # b1
            _resident((n_pad, n_pad)),                     # W2 (resident)
            _resident((1, n_pad)),                         # b2
        ],
        out_specs=pl.BlockSpec((tm, n_pad), lambda i: (i, 0)),
        compiler_params=pltpu.CompilerParams(
            dimension_semantics=("parallel",),
            vmem_limit_bytes=vmem_limit,
        ),
    )(x_p, w1_p, b1_p, w2_p, b2_p)

    return out_p[:m, :cout].reshape(*lead, cout)


class FCBlockPallas:
    """Weight-stationary FCBlock: Linear -> exact GELU -> Linear.

    Parameters use PyTorch convention (weight: (out, in), bias: (out,)).  The
    weight re-layout (transpose, 128-lane zero-pad, optional bf16 cast) is
    paid once here, not per forward call.  Zero padding is exact: padded K
    columns contribute 0, padded hidden columns are GELU(0+0)=0 against zero
    W2 rows, padded output rows/columns are sliced off.
    """

    def __init__(self, w1, b1, w2, b2, compute_dtype=None):
        cout, cin = w1.shape
        assert w2.shape == (cout, cout)
        cdtype = jnp.dtype(compute_dtype) if compute_dtype is not None else jnp.dtype(w1.dtype)

        k_pad = _round_up(cin, 128)
        n_pad = _round_up(cout, 128)

        self.cin, self.cout = cin, cout
        self.w1_p = jnp.pad(w1.T.astype(cdtype),
                            ((0, k_pad - cin), (0, n_pad - cout)))      # (K_pad, N_pad)
        self.w2_p = jnp.pad(w2.T.astype(cdtype),
                            ((0, n_pad - cout), (0, n_pad - cout)))     # (N_pad, N_pad)
        self.b1_p = jnp.pad(b1.astype(jnp.float32), (0, n_pad - cout)).reshape(1, n_pad)
        self.b2_p = jnp.pad(b2.astype(jnp.float32), (0, n_pad - cout)).reshape(1, n_pad)

    def __call__(self, x):
        assert x.shape[-1] == self.cin
        return _fc_block_forward(x, self.w1_p, self.b1_p, self.w2_p, self.b2_p,
                                 cout=self.cout)


def reference(x, w1, b1, w2, b2):
    """Pure-JAX reference of Linear -> exact GELU -> Linear (PyTorch shapes)."""
    h = x @ w1.T + b1
    h = jax.nn.gelu(h, approximate=False)
    return h @ w2.T + b2


if __name__ == "__main__":
    batch, seq, in_channels, out_channels = 2, 8, 32, 32

    key = jax.random.PRNGKey(0)
    kx, kw1, kb1, kw2, kb2 = jax.random.split(key, 5)

    x = jax.random.normal(kx, (batch, seq, in_channels), dtype=jnp.float32)
    # PyTorch-shaped parameters: weight (out, in), bias (out,).
    w1 = jax.random.normal(kw1, (out_channels, in_channels), dtype=jnp.float32) * 0.1
    b1 = jax.random.normal(kb1, (out_channels,), dtype=jnp.float32) * 0.1
    w2 = jax.random.normal(kw2, (out_channels, out_channels), dtype=jnp.float32) * 0.1
    b2 = jax.random.normal(kb2, (out_channels,), dtype=jnp.float32) * 0.1

    ref = reference(x, w1, b1, w2, b2)

    # f32 compute path (exact erf GELU, f32 MXU operands) — tight tolerance.
    block_f32 = FCBlockPallas(w1, b1, w2, b2)
    out_f32 = jax.block_until_ready(block_f32(x))
    assert out_f32.shape == (batch, seq, out_channels)
    assert jnp.allclose(out_f32, ref, atol=2e-3, rtol=2e-3)

    # bf16 compute path (full-rate MXU, halved DMA bytes); accumulation stays f32.
    block_bf16 = FCBlockPallas(w1, b1, w2, b2, compute_dtype=jnp.bfloat16)
    out_bf16 = jax.block_until_ready(block_bf16(x))
    assert out_bf16.shape == (batch, seq, out_channels)
    assert jnp.allclose(out_bf16, ref, atol=5e-2, rtol=5e-2)

    print("KERNEL_OK")
</pallas_src>

<mosaic_0001>
module attributes {stable_mosaic.version = 11 : i64} {
  func.func @_fc_block_kernel(%arg0: i32, %arg1: memref<8x128xf32, #tpu.memory_space<vmem>>, %arg2: memref<128x128xf32, #tpu.memory_space<vmem>>, %arg3: memref<1x128xf32, #tpu.memory_space<vmem>>, %arg4: memref<128x128xf32, #tpu.memory_space<vmem>>, %arg5: memref<1x128xf32, #tpu.memory_space<vmem>>, %arg6: memref<8x128xf32, #tpu.memory_space<vmem>>) attributes {dimension_semantics = [#tpu.dimension_semantics<parallel>], iteration_bounds = array<i64: 2>, scalar_prefetch = 0 : i64, scratch_operands = 0 : i64, tpu.core_type = #tpu.core_type<tc>, window_params = [{transform_indices = @transform_0, window_bounds = array<i64: 8, 128>}, {pipeline_mode = #tpu.pipeline_mode<synchronous>, transform_indices = @transform_1, window_bounds = array<i64: 128, 128>}, {pipeline_mode = #tpu.pipeline_mode<synchronous>, transform_indices = @transform_2, window_bounds = array<i64: 1, 128>}, {pipeline_mode = #tpu.pipeline_mode<synchronous>, transform_indices = @transform_3, window_bounds = array<i64: 128, 128>}, {pipeline_mode = #tpu.pipeline_mode<synchronous>, transform_indices = @transform_4, window_bounds = array<i64: 1, 128>}, {transform_indices = @transform_5, window_bounds = array<i64: 8, 128>}]} {
    %c0 = arith.constant 0 : index
    %c0_0 = arith.constant 0 : index
    %0 = vector.load %arg1[%c0, %c0_0] : memref<8x128xf32, #tpu.memory_space<vmem>>, vector<8x128xf32>
    %c0_1 = arith.constant 0 : index
    %c0_2 = arith.constant 0 : index
    %1 = vector.load %arg2[%c0_1, %c0_2] : memref<128x128xf32, #tpu.memory_space<vmem>>, vector<128x128xf32>
    %cst = arith.constant dense<0.000000e+00> : vector<8x128xf32>
    %2 = tpu.matmul %0, %1, %cst {dimension_numbers = #tpu.dot_dimension_numbers<[1], [0], [0], [1], [0, 0, 1, 1], [], []>} : vector<8x128xf32>, vector<128x128xf32>, vector<8x128xf32> -> vector<8x128xf32>
    %c0_3 = arith.constant 0 : index
    %c0_4 = arith.constant 0 : index
    %3 = vector.load %arg3[%c0_3, %c0_4] : memref<1x128xf32, #tpu.memory_space<vmem>>, vector<1x128xf32>
    %4 = vector.broadcast %3 : vector<1x128xf32> to vector<8x128xf32>
    %5 = arith.addf %2, %4 : vector<8x128xf32>
    %cst_5 = arith.constant 5.000000e-01 : f32
    %6 = vector.broadcast %cst_5 : f32 to vector<8x128xf32>
    %7 = arith.mulf %6, %5 : vector<8x128xf32>
    %cst_6 = arith.constant 0.707106769 : f32
    %8 = vector.broadcast %cst_6 : f32 to vector<8x128xf32>
    %9 = arith.mulf %5, %8 : vector<8x128xf32>
    %10 = math.erf %9 : vector<8x128xf32>
    %cst_7 = arith.constant 1.000000e+00 : f32
    %11 = vector.broadcast %cst_7 : f32 to vector<8x128xf32>
    %12 = arith.addf %11, %10 : vector<8x128xf32>
    %13 = arith.mulf %7, %12 : vector<8x128xf32>
    %c0_8 = arith.constant 0 : index
    %c0_9 = arith.constant 0 : index
    %14 = vector.load %arg4[%c0_8, %c0_9] : memref<128x128xf32, #tpu.memory_space<vmem>>, vector<128x128xf32>
    %cst_10 = arith.constant dense<0.000000e+00> : vector<8x128xf32>
    %15 = tpu.matmul %13, %14, %cst_10 {dimension_numbers = #tpu.dot_dimension_numbers<[1], [0], [0], [1], [0, 0, 1, 1], [], []>} : vector<8x128xf32>, vector<128x128xf32>, vector<8x128xf32> -> vector<8x128xf32>
    %c0_11 = arith.constant 0 : index
    %c0_12 = arith.constant 0 : index
    %16 = vector.load %arg5[%c0_11, %c0_12] : memref<1x128xf32, #tpu.memory_space<vmem>>, vector<1x128xf32>
    %17 = vector.broadcast %16 : vector<1x128xf32> to vector<8x128xf32>
    %18 = arith.addf %15, %17 : vector<8x128xf32>
    %c0_13 = arith.constant 0 : index
    %c0_14 = arith.constant 0 : index
    %19 = vector.load %arg6[%c0_13, %c0_14] : memref<8x128xf32, #tpu.memory_space<vmem>>, vector<8x128xf32>
    tpu.vector_store %arg6[%c0_13, %c0_14], %18 {strides = array<i32>} : memref<8x128xf32, #tpu.memory_space<vmem>>, vector<8x128xf32>,
    return
  }
  func.func @transform_0(%arg0: i32) -> (i32, i32) {
    %c0_i32 = arith.constant 0 : i32
    %c0_i32_0 = arith.constant 0 : i32
    return %arg0, %c0_i32 : i32, i32
  }
  func.func @transform_1(%arg0: i32) -> (i32, i32) {
    %c0_i32 = arith.constant 0 : i32
    %c0_i32_0 = arith.constant 0 : i32
    %c0_i32_1 = arith.constant 0 : i32
    return %c0_i32, %c0_i32_0 : i32, i32
  }
  func.func @transform_2(%arg0: i32) -> (i32, i32) {
    %c0_i32 = arith.constant 0 : i32
    %c0_i32_0 = arith.constant 0 : i32
    %c0_i32_1 = arith.constant 0 : i32
    return %c0_i32, %c0_i32_0 : i32, i32
  }
  func.func @transform_3(%arg0: i32) -> (i32, i32) {
    %c0_i32 = arith.constant 0 : i32
    %c0_i32_0 = arith.constant 0 : i32
    %c0_i32_1 = arith.constant 0 : i32
    return %c0_i32, %c0_i32_0 : i32, i32
  }
  func.func @transform_4(%arg0: i32) -> (i32, i32) {
    %c0_i32 = arith.constant 0 : i32
    %c0_i32_0 = arith.constant 0 : i32
    %c0_i32_1 = arith.constant 0 : i32
    return %c0_i32, %c0_i32_0 : i32, i32
  }
  func.func @transform_5(%arg0: i32) -> (i32, i32) {
    %c0_i32 = arith.constant 0 : i32
    %c0_i32_0 = arith.constant 0 : i32
    return %arg0, %c0_i32 : i32, i32
  }
}

</mosaic_0001>

<llo_original>
// kernel: _fc_block_forward.1
$region0: #{_fc_block_forward.1}
  #allocation0 [shape = 'u32[]', space=smem, size = 0x4, offset = 0x4, fixed_abs, tag = 'smem constant byte address 0x4 - core index']
  #allocation1 [shape = 'u32[144,128]{1,0:T(1,128)}', space=vmem, size = 0x12000, scoped, tag = 'internal scratch']
  %s0 = inlined_call_operand.vmem [shape: f32[16,128], index: 0, kind: input, shape index: {}]
  %s1 = inlined_call_operand.hbm [shape: f32[128,128], index: 1, kind: input, shape index: {}]
  %s2 = inlined_call_operand.vmem [shape: f32[1,128], index: 2, kind: input, shape index: {}]
  %s3 = inlined_call_operand.hbm [shape: f32[128,128], index: 3, kind: input, shape index: {}]
  %s4 = inlined_call_operand.vmem [shape: f32[1,128], index: 4, kind: input, shape index: {}]
  %s5 = inlined_call_operand.vmem [shape: f32[16,128], index: 5, kind: output, shape index: {}]
  %s6 = sld [smem:[#allocation0]]
  $region61: #{_fc_block_forward.1} parent=0
    _
  %s8 = ssub.s32 1, %s6
  %s9 = scalar_select 0, %s8, %s6
  $region1: #{_fc_block_forward.1} parent=0
    #allocation2 [shape = 'u8[65536]{0}', space=vmem, size = 0x10000, scoped, tag = 'input window, operand 1, single buffered']
    #allocation3 [shape = 's32[2]{0}', space=sflag, size = 0x8, scoped, tag = 'scoped memory for _fc_block_forward.1']
    #allocation4 [shape = 'u8[65536]{0}', space=vmem, size = 0x10000, scoped, tag = 'input window, operand 3, single buffered']
    #allocation5 [shape = 's32[1]{0}', space=sflag, size = 0x4, scoped, tag = 'scoped memory for _fc_block_forward.1']
    %10 = vsyncpa [#allocation3], 0
    %11 = vsyncpa [#allocation5], 0
    loop: start=0, step=1, limit=4
    $region2: #{_fc_block_forward.1} parent=1 // loop_pre_header
      _
    $region3: #{_fc_block_forward.1} parent=1 // loop_header
      %s13 = sphi 0, %s17
      %p14 = scmp.ge.s32.totalorder %s13, 4
      %s23 = sphi 0, %s25
      %s26 = sphi 0, %s23
      %s27 = sphi 0, %s26
      %s43 = sphi 0, %s27
      %s47 = sphi 0, %s47
      %s49 = sphi 0, %s47
      %s50 = sphi 0, %s49
      %s64 = sphi 0, %s50
      %s68 = sphi 0, %s68
      %s70 = sphi 0, %s68
      %s71 = sphi 0, %s70
      %s85 = sphi 0, %s71
      %s89 = sphi 0, %s89
      %s91 = sphi 0, %s89
      %s92 = sphi 0, %s91
      %s106 = sphi 0, %s92
      %s110 = sphi 0, %s110
      %s112 = sphi 0, %s110
      %s113 = sphi 0, %s112
      %s127 = sphi 0, %s113
      %s133 = sphi 0, %s135
      %s136 = sphi 0, %s133
      %s137 = sphi 0, %s136
      %s153 = sphi 0, %s137
    $region4: #{_fc_block_forward.1} parent=1 // loop_header_branch
      %16 = sbr.rel (%p14) target = $region8
    $region5: #{_fc_block_forward.1} parent=1 // loop_body
      %s18 = ssub.s32 %s13, 1
      %s19 = ssub.s32 %s13, 2
      %s20 = sadd.s32 %s13, 1
      %s21 = ssub.s32 %s13, %s20
      %p22 = scmp.eq.s32.totalorder %s21, 0
      %s24 = sadd.s32 %s23, 1
      %s25 = scalar_select %p22, %s23, %s24
      %p28 = pneg %p22
      %p29 = scmp.eq.s32.totalorder %s13, 1
      %p30 = por %p28, %p29
      %p31 = scmp.ne.s32.totalorder %s23, %s26
      %p32 = scmp.eq.s32.totalorder %s13, 0
      %p33 = por %p31, %p32
      %p34 = scmp.ne.s32.totalorder %s23, %s26
      %p35 = scmp.eq.s32.totalorder %s18, 1
      %p36 = por %p34, %p35
      %p37 = scmp.ne.s32.totalorder %s26, %s27
      %p38 = scmp.eq.s32.totalorder %s18, 0
      %p39 = por %p37, %p38
      %p40 = scmp.ne.s32.totalorder %s26, %s27
      %p41 = scmp.eq.s32.totalorder %s19, 1
      %p42 = por %p40, %p41
      %p44 = scmp.ne.s32.totalorder %s27, %s43
      %p45 = scmp.eq.s32.totalorder %s19, 0
      %p46 = por %p44, %p45
      %s48 = sadd.s32 %s47, 1
      %p51 = scmp.eq.s32.totalorder %s13, 1
      %p52 = scmp.ne.s32.totalorder %s47, %s49
      %p53 = scmp.eq.s32.totalorder %s13, 0
      %p54 = por %p52, %p53
      %p55 = scmp.ne.s32.totalorder %s47, %s49
      %p56 = scmp.eq.s32.totalorder %s18, 1
      %p57 = por %p55, %p56
      %p58 = scmp.ne.s32.totalorder %s49, %s50
      %p59 = scmp.eq.s32.totalorder %s18, 0
      %p60 = por %p58, %p59
      %p61 = scmp.ne.s32.totalorder %s49, %s50
      %p62 = scmp.eq.s32.totalorder %s19, 1
      %p63 = por %p61, %p62
      %p65 = scmp.ne.s32.totalorder %s50, %s64
      %p66 = scmp.eq.s32.totalorder %s19, 0
      %p67 = por %p65, %p66
      %s69 = sadd.s32 %s68, 1
      %p72 = scmp.eq.s32.totalorder %s13, 1
      %p73 = scmp.ne.s32.totalorder %s68, %s70
      %p74 = scmp.eq.s32.totalorder %s13, 0
      %p75 = por %p73, %p74
      %p76 = scmp.ne.s32.totalorder %s68, %s70
      %p77 = scmp.eq.s32.totalorder %s18, 1
      %p78 = por %p76, %p77
      %p79 = scmp.ne.s32.totalorder %s70, %s71
      %p80 = scmp.eq.s32.totalorder %s18, 0
      %p81 = por %p79, %p80
      %p82 = scmp.ne.s32.totalorder %s70, %s71
      %p83 = scmp.eq.s32.totalorder %s19, 1
      %p84 = por %p82, %p83
      %p86 = scmp.ne.s32.totalorder %s71, %s85
      %p87 = scmp.eq.s32.totalorder %s19, 0
      %p88 = por %p86, %p87
      %s90 = sadd.s32 %s89, 1
      %p93 = scmp.eq.s32.totalorder %s13, 1
      %p94 = scmp.ne.s32.totalorder %s89, %s91
      %p95 = scmp.eq.s32.totalorder %s13, 0
      %p96 = por %p94, %p95
      %p97 = scmp.ne.s32.totalorder %s89, %s91
      %p98 = scmp.eq.s32.totalorder %s18, 1
      %p99 = por %p97, %p98
      %p100 = scmp.ne.s32.totalorder %s91, %s92
      %p101 = scmp.eq.s32.totalorder %s18, 0
      %p102 = por %p100, %p101
      %p103 = scmp.ne.s32.totalorder %s91, %s92
      %p104 = scmp.eq.s32.totalorder %s19, 1
      %p105 = por %p103, %p104
      %p107 = scmp.ne.s32.totalorder %s92, %s106
      %p108 = scmp.eq.s32.totalorder %s19, 0
      %p109 = por %p107, %p108
      %s111 = sadd.s32 %s110, 1
      %p114 = scmp.eq.s32.totalorder %s13, 1
      %p115 = scmp.ne.s32.totalorder %s110, %s112
      %p116 = scmp.eq.s32.totalorder %s13, 0
      %p117 = por %p115, %p116
      %p118 = scmp.ne.s32.totalorder %s110, %s112
      %p119 = scmp.eq.s32.totalorder %s18, 1
      %p120 = por %p118, %p119
      %p121 = scmp.ne.s32.totalorder %s112, %s113
      %p122 = scmp.eq.s32.totalorder %s18, 0
      %p123 = por %p121, %p122
      %p124 = scmp.ne.s32.totalorder %s112, %s113
      %p125 = scmp.eq.s32.totalorder %s19, 1
      %p126 = por %p124, %p125
      %p128 = scmp.ne.s32.totalorder %s113, %s127
      %p129 = scmp.eq.s32.totalorder %s19, 0
      %p130 = por %p128, %p129
      %s131 = ssub.s32 %s13, %s20
      %p132 = scmp.eq.s32.totalorder %s131, 0
      %s134 = sadd.s32 %s133, 1
      %s135 = scalar_select %p132, %s133, %s134
      %p138 = pneg %p132
      %p139 = scmp.eq.s32.totalorder %s13, 1
      %p140 = por %p138, %p139
      %p141 = scmp.ne.s32.totalorder %s133, %s136
      %p142 = scmp.eq.s32.totalorder %s13, 0
      %p143 = por %p141, %p142
      %p144 = scmp.ne.s32.totalorder %s133, %s136
      %p145 = scmp.eq.s32.totalorder %s18, 1
      %p146 = por %p144, %p145
      %p147 = scmp.ne.s32.totalorder %s136, %s137
      %p148 = scmp.eq.s32.totalorder %s18, 0
      %p149 = por %p147, %p148
      %p150 = scmp.ne.s32.totalorder %s136, %s137
      %p151 = scmp.eq.s32.totalorder %s19, 1
      %p152 = por %p150, %p151
      %p154 = scmp.ne.s32.totalorder %s137, %s153
      %p155 = scmp.eq.s32.totalorder %s19, 0
      %p156 = por %p154, %p155
      %p157 = scmp.le.s32.totalorder 1, %s13
      %p158 = scmp.lt.s32.totalorder %s13, 3
      %p159 = pnand %p157, %p158
      %p160 = pneg %p159
      // Predicated region
      $region9: #{_fc_block_forward.1} parent=5 // pred_check
        _
      $region10: #{_fc_block_forward.1} parent=5 // pred_check_branch
        %162 = sbr.rel (%p159) target = $region12
      $region11: #{_fc_block_forward.1} parent=5 // pred_region
        %s163 = ssub.s32 %s13, 1
        // Predicated region
        $region13: #{_fc_block_forward.1} parent=11 // pred_check
          %p164 = pneg %p60
        $region14: #{_fc_block_forward.1} parent=11 // pred_check_branch
          %166 = sbr.rel (%p164) target = $region16
        $region15: #{_fc_block_forward.1} parent=11 // pred_region
          %s168 = ssub.s32 2048, 2048
          %169 = vsyncadd [#allocation3], %s168
          %s170 = sshll.u32 [#allocation2], 4
          %s171 = int_to_ptr.vmem [resolvable:$true] %s170
          %176 = dma.hbm_to_vmem [thread:$0]  %s1, 2048, %s171, [#allocation3], 128, 128, 8
        $region16: #{_fc_block_forward.1} parent=11 // pred_fallthru
          _
        // Predicated region
        $region17: #{_fc_block_forward.1} parent=11 // pred_check
          %p177 = pneg %p81
        $region18: #{_fc_block_forward.1} parent=11 // pred_check_branch
          %179 = sbr.rel (%p177) target = $region20
        $region19: #{_fc_block_forward.1} parent=11 // pred_region
          _
        $region20: #{_fc_block_forward.1} parent=11 // pred_fallthru
          _
        // Predicated region
        $region21: #{_fc_block_forward.1} parent=11 // pred_check
          %p180 = pneg %p102
        $region22: #{_fc_block_forward.1} parent=11 // pred_check_branch
          %182 = sbr.rel (%p180) target = $region24
        $region23: #{_fc_block_forward.1} parent=11 // pred_region
          %s184 = ssub.s32 2048, 2048
          %185 = vsyncadd [#allocation5], %s184
          %s186 = sshll.u32 [#allocation4], 4
          %s187 = int_to_ptr.vmem [resolvable:$true] %s186
          %192 = dma.hbm_to_vmem [thread:$0]  %s3, 2048, %s187, [#allocation5], 128, 128, 8
        $region24: #{_fc_block_forward.1} parent=11 // pred_fallthru
          _
        // Predicated region
        $region25: #{_fc_block_forward.1} parent=11 // pred_check
          %p193 = pneg %p123
        $region26: #{_fc_block_forward.1} parent=11 // pred_check_branch
          %195 = sbr.rel (%p193) target = $region28
        $region27: #{_fc_block_forward.1} parent=11 // pred_region
          _
        $region28: #{_fc_block_forward.1} parent=11 // pred_fallthru
          _
      $region12: #{_fc_block_forward.1} parent=5 // pred_fallthru
        _
      %p196 = scmp.lt.s32.totalorder %s13, 2
      // Predicated region
      $region29: #{_fc_block_forward.1} parent=5 // pred_check
        %p197 = pneg %p196
      $region30: #{_fc_block_forward.1} parent=5 // pred_check_branch
        %199 = sbr.rel (%p197) target = $region32
      $region31: #{_fc_block_forward.1} parent=5 // pred_region
        // Predicated region
        $region33: #{_fc_block_forward.1} parent=31 // pred_check
          %p200 = pneg %p33
        $region34: #{_fc_block_forward.1} parent=31 // pred_check_branch
          %202 = sbr.rel (%p200) target = $region36
        $region35: #{_fc_block_forward.1} parent=31 // pred_region
          %p203 = scmp.lt.s32.totalorder %s13, 1
          %s204 = scalar_select %p203, %s13, 1
          %s205 = smul.addr %s204, 8
          %s206 = scalar_lea.vmem %s0, %s205
        $region36: #{_fc_block_forward.1} parent=31 // pred_fallthru
          _
      $region32: #{_fc_block_forward.1} parent=5 // pred_fallthru
        _
      %p207 = scmp.le.s32.totalorder 1, %s13
      %p208 = scmp.lt.s32.totalorder %s13, 3
      %p209 = pnand %p207, %p208
      %p210 = pneg %p209
      // Predicated region
      $region37: #{_fc_block_forward.1} parent=5 // pred_check
        _
      $region38: #{_fc_block_forward.1} parent=5 // pred_check_branch
        %212 = sbr.rel (%p209) target = $region40
      $region39: #{_fc_block_forward.1} parent=5 // pred_region
        %s213 = ssub.s32 %s13, 1
        // Predicated region
        $region41: #{_fc_block_forward.1} parent=39 // pred_check
          %p214 = pneg %p60
        $region42: #{_fc_block_forward.1} parent=39 // pred_check_branch
          %216 = sbr.rel (%p214) target = $region44
        $region43: #{_fc_block_forward.1} parent=39 // pred_region
          %217 = dma.done [#allocation3], 2048
        $region44: #{_fc_block_forward.1} parent=39 // pred_fallthru
          _
        // Predicated region
        $region45: #{_fc_block_forward.1} parent=39 // pred_check
          %p218 = pneg %p102
        $region46: #{_fc_block_forward.1} parent=39 // pred_check_branch
          %220 = sbr.rel (%p218) target = $region48
        $region47: #{_fc_block_forward.1} parent=39 // pred_region
          %221 = dma.done [#allocation5], 2048
        $region48: #{_fc_block_forward.1} parent=39 // pred_fallthru
          _
        %p222 = scmp.lt.s32.totalorder %s18, 1
        %s223 = scalar_select %p222, %s18, 1
        %s224 = smul.addr %s223, 8
        %s225 = scalar_lea.vmem %s0, %s224
        %p226 = pneg %p39
        %p227 = pneg %p36
        %p228 = pneg %p60
        %p229 = pneg %p57
        %p230 = pneg %p81
        %p231 = pneg %p78
        %p232 = pneg %p102
        %p233 = pneg %p99
        %p234 = pneg %p123
        %p235 = pneg %p120
        %p236 = pneg %p149
        %p237 = pneg %p146
        %p238 = scmp.lt.s32.totalorder %s18, 1
        %s239 = scalar_select %p238, %s18, 1
        %s240 = smul.addr %s239, 8
        %s241 = scalar_lea.vmem %s5, %s240
        %p242 = scmp.lt.s32.totalorder %s18, 1
        %s243 = scalar_select %p242, %s18, 1
        %s244 = smul.addr %s243, 8
        %s245 = scalar_lea.vmem %s0, %s244
        %p246 = scmp.lt.s32.totalorder %s18, 1
        %s247 = scalar_select %p246, %s18, 1
        %s248 = smul.addr %s247, 8
        %s249 = scalar_lea.vmem %s5, %s248
        %v250 = vld [vmem:[%s245] sm:$0xff]
        %v251 = vld [vmem:[#allocation2] sm:$0xff]
        %v252 = vld [vmem:[#allocation2 + $0x8] sm:$0xff]
        %v253 = vld [vmem:[#allocation2 + $0x10] sm:$0xff]
        %v254 = vld [vmem:[#allocation2 + $0x18] sm:$0xff]
        %v255 = vld [vmem:[#allocation2 + $0x20] sm:$0xff]
        %v256 = vld [vmem:[#allocation2 + $0x28] sm:$0xff]
        %v257 = vld [vmem:[#allocation2 + $0x30] sm:$0xff]
        %v258 = vld [vmem:[#allocation2 + $0x38] sm:$0xff]
        %v259 = vld [vmem:[#allocation2 + $0x40] sm:$0xff]
        %v260 = vld [vmem:[#allocation2 + $0x48] sm:$0xff]
        %v261 = vld [vmem:[#allocation2 + $0x50] sm:$0xff]
        %v262 = vld [vmem:[#allocation2 + $0x58] sm:$0xff]
        %v263 = vld [vmem:[#allocation2 + $0x60] sm:$0xff]
        %v264 = vld [vmem:[#allocation2 + $0x68] sm:$0xff]
        %v265 = vld [vmem:[#allocation2 + $0x70] sm:$0xff]
        %v266 = vld [vmem:[#allocation2 + $0x78] sm:$0xff]
        %v267 = vld [vmem:[%s2] sm:$0x1]
        %v269 = vlaneseq
        %v270 = vshrl.u32 %v269, 7
        %v271 = vsub.s32 0, %v270
        %v272 = vrot.slane %v267, %v271
        %274 = vmatprep.subr.mxu0 0.0
        %275 = vmatpush1.msra.mxu0 %v251
        %276 = vmatprep.subr.mxu0 0.0
        %277 = vmatpush1.msra.mxu0 %v252
        %278 = vmatprep.subr.mxu0 0.0
        %279 = vmatpush1.msra.mxu0 %v253
        %280 = vmatprep.subr.mxu0 0.0
        %281 = vmatpush1.msra.mxu0 %v254
        %282 = vmatprep.subr.mxu0 0.0
        %283 = vmatpush1.msra.mxu0 %v255
        %284 = vmatprep.subr.mxu0 0.0
        %285 = vmatpush1.msra.mxu0 %v256
        %286 = vmatprep.subr.mxu0 0.0
        %287 = vmatpush1.msra.mxu0 %v257
        %288 = vmatprep.subr.mxu0 0.0
        %289 = vmatpush1.msra.mxu0 %v258
        %290 = vmatprep.subr.mxu0 0.0
        %291 = vmatpush1.msra.mxu0 %v259
        %292 = vmatprep.subr.mxu0 0.0
        %293 = vmatpush1.msra.mxu0 %v260
        %294 = vmatprep.subr.mxu0 0.0
        %295 = vmatpush1.msra.mxu0 %v261
        %296 = vmatprep.subr.mxu0 0.0
        %297 = vmatpush1.msra.mxu0 %v262
        %298 = vmatprep.subr.mxu0 0.0
        %299 = vmatpush1.msra.mxu0 %v263
        %300 = vmatprep.subr.mxu0 0.0
        %301 = vmatpush1.msra.mxu0 %v264
        %302 = vmatprep.subr.mxu0 0.0
        %303 = vmatpush1.msra.mxu0 %v265
        %304 = vmatprep.subr.mxu0 0.0
        %305 = vmatpush1.msra.mxu0 %v266
        %306 = vmatprep.subr.mxu0 0.0
        %307 = vmatpush1.msra.mxu0 0.0
        %308 = vmatprep.subr.mxu0 0.0
        %309 = vmatpush1.msra.mxu0 0.0
        %310 = vmatprep.subr.mxu0 0.0
        %311 = vmatpush1.msra.mxu0 0.0
        %312 = vmatprep.subr.mxu0 0.0
        %313 = vmatpush1.msra.mxu0 0.0
        %314 = vmatprep.subr.mxu0 0.0
        %315 = vmatpush1.msra.mxu0 0.0
        %316 = vmatprep.subr.mxu0 0.0
        %317 = vmatpush1.msra.mxu0 0.0
        %318 = vmatprep.subr.mxu0 0.0
        %319 = vmatpush1.msra.mxu0 0.0
        %320 = vmatprep.subr.mxu0 0.0
        %321 = vmatpush1.msra.mxu0 0.0
        %322 = vmatprep.subr.mxu0 0.0
        %323 = vmatpush1.msra.mxu0 0.0
        %324 = vmatprep.subr.mxu0 0.0
        %325 = vmatpush1.msra.mxu0 0.0
        %326 = vmatprep.subr.mxu0 0.0
        %327 = vmatpush1.msra.mxu0 0.0
        %328 = vmatprep.subr.mxu0 0.0
        %329 = vmatpush1.msra.mxu0 0.0
        %330 = vmatprep.subr.mxu0 0.0
        %331 = vmatpush1.msra.mxu0 0.0
        %332 = vmatprep.subr.mxu0 0.0
        %333 = vmatpush1.msra.mxu0 0.0
        %334 = vmatprep.subr.mxu0 0.0
        %335 = vmatpush1.msra.mxu0 0.0
        %336 = vmatprep.subr.mxu0 0.0
        %337 = vmatpush1.msra.mxu0 0.0
        %338 = vmatprep.mubr.f32.mxu0 0.0
        %339 = vmatmul.mubr.f32.gmra.mrb[0].mxu0 %v250
        %v340 = vpop.f32.mrb[0].mxu0
        %v341 = vadd.f32 %v272, %v340
        %v342 = vpop.f32.mrb[0].mxu0
        %343 = vdwg.mxu0
        %v344 = vmul.f32 %v341, 0.5
        %v345 = vmul.f32 %v341, 0.70710677
        %v346 = verf.f32.pop %v345
        %v347 = vadd.f32 %v346, 1.0
        %v348 = vmul.f32 %v344, %v347
        %v349 = vld [vmem:[#allocation4] sm:$0xff]
        %v350 = vld [vmem:[#allocation4 + $0x8] sm:$0xff]
        %v351 = vld [vmem:[#allocation4 + $0x10] sm:$0xff]
        %v352 = vld [vmem:[#allocation4 + $0x18] sm:$0xff]
        %v353 = vld [vmem:[#allocation4 + $0x20] sm:$0xff]
        %v354 = vld [vmem:[#allocation4 + $0x28] sm:$0xff]
        %v355 = vld [vmem:[#allocation4 + $0x30] sm:$0xff]
        %v356 = vld [vmem:[#allocation4 + $0x38] sm:$0xff]
        %v357 = vld [vmem:[#allocation4 + $0x40] sm:$0xff]
        %v358 = vld [vmem:[#allocation4 + $0x48] sm:$0xff]
        %v359 = vld [vmem:[#allocation4 + $0x50] sm:$0xff]
        %v360 = vld [vmem:[#allocation4 + $0x58] sm:$0xff]
        %v361 = vld [vmem:[#allocation4 + $0x60] sm:$0xff]
        %v362 = vld [vmem:[#allocation4 + $0x68] sm:$0xff]
        %v363 = vld [vmem:[#allocation4 + $0x70] sm:$0xff]
        %v364 = vld [vmem:[#allocation4 + $0x78] sm:$0xff]
        %v365 = vld [vmem:[%s4] sm:$0x1]
        %v367 = vlaneseq
        %v368 = vshrl.u32 %v367, 7
        %v369 = vsub.s32 0, %v368
        %v370 = vrot.slane %v365, %v369
        %372 = vmatprep.subr.mxu0 0.0
        %373 = vmatpush1.msra.mxu0 %v349
        %374 = vmatprep.subr.mxu0 0.0
        %375 = vmatpush1.msra.mxu0 %v350
        %376 = vmatprep.subr.mxu0 0.0
        %377 = vmatpush1.msra.mxu0 %v351
        %378 = vmatprep.subr.mxu0 0.0
        %379 = vmatpush1.msra.mxu0 %v352
        %380 = vmatprep.subr.mxu0 0.0
        %381 = vmatpush1.msra.mxu0 %v353
        %382 = vmatprep.subr.mxu0 0.0
        %383 = vmatpush1.msra.mxu0 %v354
        %384 = vmatprep.subr.mxu0 0.0
        %385 = vmatpush1.msra.mxu0 %v355
        %386 = vmatprep.subr.mxu0 0.0
        %387 = vmatpush1.msra.mxu0 %v356
        %388 = vmatprep.subr.mxu0 0.0
        %389 = vmatpush1.msra.mxu0 %v357
        %390 = vmatprep.subr.mxu0 0.0
        %391 = vmatpush1.msra.mxu0 %v358
        %392 = vmatprep.subr.mxu0 0.0
        %393 = vmatpush1.msra.mxu0 %v359
        %394 = vmatprep.subr.mxu0 0.0
        %395 = vmatpush1.msra.mxu0 %v360
        %396 = vmatprep.subr.mxu0 0.0
        %397 = vmatpush1.msra.mxu0 %v361
        %398 = vmatprep.subr.mxu0 0.0
        %399 = vmatpush1.msra.mxu0 %v362
        %400 = vmatprep.subr.mxu0 0.0
        %401 = vmatpush1.msra.mxu0 %v363
        %402 = vmatprep.subr.mxu0 0.0
        %403 = vmatpush1.msra.mxu0 %v364
        %404 = vmatprep.subr.mxu0 0.0
        %405 = vmatpush1.msra.mxu0 0.0
        %406 = vmatprep.subr.mxu0 0.0
        %407 = vmatpush1.msra.mxu0 0.0
        %408 = vmatprep.subr.mxu0 0.0
        %409 = vmatpush1.msra.mxu0 0.0
        %410 = vmatprep.subr.mxu0 0.0
        %411 = vmatpush1.msra.mxu0 0.0
        %412 = vmatprep.subr.mxu0 0.0
        %413 = vmatpush1.msra.mxu0 0.0
        %414 = vmatprep.subr.mxu0 0.0
        %415 = vmatpush1.msra.mxu0 0.0
        %416 = vmatprep.subr.mxu0 0.0
        %417 = vmatpush1.msra.mxu0 0.0
        %418 = vmatprep.subr.mxu0 0.0
        %419 = vmatpush1.msra.mxu0 0.0
        %420 = vmatprep.subr.mxu0 0.0
        %421 = vmatpush1.msra.mxu0 0.0
        %422 = vmatprep.subr.mxu0 0.0
        %423 = vmatpush1.msra.mxu0 0.0
        %424 = vmatprep.subr.mxu0 0.0
        %425 = vmatpush1.msra.mxu0 0.0
        %426 = vmatprep.subr.mxu0 0.0
        %427 = vmatpush1.msra.mxu0 0.0
        %428 = vmatprep.subr.mxu0 0.0
        %429 = vmatpush1.msra.mxu0 0.0
        %430 = vmatprep.subr.mxu0 0.0
        %431 = vmatpush1.msra.mxu0 0.0
        %432 = vmatprep.subr.mxu0 0.0
        %433 = vmatpush1.msra.mxu0 0.0
        %434 = vmatprep.subr.mxu0 0.0
        %435 = vmatpush1.msra.mxu0 0.0
        %436 = vmatprep.mubr.f32.mxu0 0.0
        %437 = vmatmul.mubr.f32.gmra.mrb[0].mxu0 %v348
        %v438 = vpop.f32.mrb[0].mxu0
        %v439 = vadd.f32 %v370, %v438
        %v440 = vpop.f32.mrb[0].mxu0
        %441 = vdwg.mxu0
        %442 = vst [vmem:[%s249] sm:$0xff] %v439
        %p443 = scmp.lt.s32.totalorder %s18, 1
        %s444 = scalar_select %p443, %s18, 1
        %s445 = smul.addr %s444, 8
        %s446 = scalar_lea.vmem %s5, %s445
        // Predicated region
        $region49: #{_fc_block_forward.1} parent=39 // pred_check
          %p447 = pneg %p146
        $region50: #{_fc_block_forward.1} parent=39 // pred_check_branch
          %449 = sbr.rel (%p447) target = $region52
        $region51: #{_fc_block_forward.1} parent=39 // pred_region
          _
        $region52: #{_fc_block_forward.1} parent=39 // pred_fallthru
          _
      $region40: #{_fc_block_forward.1} parent=5 // pred_fallthru
        _
      %p450 = scmp.le.s32.totalorder 2, %s13
      // Predicated region
      $region53: #{_fc_block_forward.1} parent=5 // pred_check
        %p451 = pneg %p450
      $region54: #{_fc_block_forward.1} parent=5 // pred_check_branch
        %453 = sbr.rel (%p451) target = $region56
      $region55: #{_fc_block_forward.1} parent=5 // pred_region
        %s454 = ssub.s32 %s13, 2
        // Predicated region
        $region57: #{_fc_block_forward.1} parent=55 // pred_check
          %p455 = pneg %p152
        $region58: #{_fc_block_forward.1} parent=55 // pred_check_branch
          %457 = sbr.rel (%p455) target = $region60
        $region59: #{_fc_block_forward.1} parent=55 // pred_region
          %p458 = scmp.lt.s32.totalorder %s19, 1
          %s459 = scalar_select %p458, %s19, 1
          %s460 = smul.addr %s459, 8
          %s461 = scalar_lea.vmem %s5, %s460
        $region60: #{_fc_block_forward.1} parent=55 // pred_fallthru
          _
      $region56: #{_fc_block_forward.1} parent=5 // pred_fallthru
        _
    $region6: #{_fc_block_forward.1} parent=1 // loop_footer
      %s17 = sadd.s32 1, %s13
    $region7: #{_fc_block_forward.1} parent=1 // loop_footer_branch
      %12 = sbr.rel target = $region3
    $region8: #{_fc_block_forward.1} parent=1 // loop_exit
      _
    %462 = vsyncpa [#allocation3], 1
    %s463 = scalar_lea.sflag [#allocation3], 1
    %464 = vsyncpa %s463, 1
    %465 = vsyncpa [#allocation5], 1

</llo_original>
